<compile_context>
chip_gen: v5e
topology: v5e:2x2
jax: 0.10.0
libtpu: 0.0.40
codegen_flags: <defaults>
</compile_context>

<pallas_src>
import jax
import jax.numpy as jnp
from jax.experimental import pallas as pl
from jax.experimental.pallas import tpu as pltpu


def _make_kernel(seq_len, ts, inv_s, ragged_s):
    def kernel(x_ref, w1_ref, b1_ref, w2t_ref, b2_ref, o_ref, acc_ref):
        # x_ref:  (tb, ts, D) in input dtype     w1_ref: (D, H)    b1_ref: (1, H)
        # w2t_ref:(1, H)                         b2_ref: (1, 1) in SMEM
        # o_ref:  (tb, 1)                        acc_ref:(tb, D) f32 scratch
        s = pl.program_id(1)

        @pl.when(s == 0)
        def _():
            acc_ref[...] = jnp.zeros_like(acc_ref)

        # Accumulate raw sums over the sequence tile; DMA stays in the input dtype,
        # accumulation is f32 in scratch.
        xv = x_ref[...].astype(jnp.float32)
        if ragged_s:
            # Mask rows past the true sequence length (only the tail tile is partial;
            # the predicate is trivially true for full tiles).
            seq_idx = jax.lax.broadcasted_iota(jnp.int32, (1, ts, 1), 1)
            valid = (s * ts + seq_idx) < seq_len
            xv = jnp.where(valid, xv, 0.0)
        acc_ref[...] += jnp.sum(xv, axis=1)

        @pl.when(s == pl.num_programs(1) - 1)
        def _():
            pooled = acc_ref[...] * inv_s                         # mean, divide once
            h = jnp.dot(pooled, w1_ref[...],
                        preferred_element_type=jnp.float32) + b1_ref[...]
            h = jnp.maximum(h, 0.0)                               # ReLU
            # N=1 projection as VPU mul + lane reduce (avoids a 1-lane MXU matmul).
            out = jnp.sum(h * w2t_ref[...].astype(jnp.float32),
                          axis=-1, keepdims=True) + b2_ref[0, 0]
            o_ref[...] = out.astype(o_ref.dtype)

    return kernel


def _vmem_limit_bytes():
    # Generation-aware VMEM budget: ~70% of physical per-TC VMEM, capped at 100 MiB
    # (v5e/v6e: 128 MiB physical -> ~90 MiB; v7x: 64 MiB physical -> ~45 MiB).
    phys = 64 * 1024 * 1024  # conservative fallback (v7x per-TC)
    try:
        phys = int(pltpu.get_tpu_info().vmem_capacity_bytes)
    except Exception:
        pass
    return min(int(phys * 0.7), 100 * 1024 * 1024)


def _derive_tiles(B, S, D, H, x_dtype, w_dtype, vmem_limit):
    x_item = jnp.dtype(x_dtype).itemsize
    w_item = jnp.dtype(w_dtype).itemsize

    # Batch tile: 8 rows where possible so accumulator vregs / finalize matmul rows
    # are sublane-aligned; ragged B is handled by the cdiv grid.
    tb = min(B, 8)

    # Sequence-tile alignment: sub-32-bit dtypes pack rows along sublanes.
    align = max(8, 32 // x_item)

    # VMEM resident for the whole kernel: single-buffered w1/b1/w2t, f32 accumulator
    # scratch, plus slack for compiler-internal scratch and the tiny output.
    resident = D * H * w_item + 2 * H * 4 + tb * D * 4 + (2 << 20)
    avail = max(vmem_limit - resident, 0)

    row_bytes = tb * D * x_item                      # one sequence row of an x tile
    ts_cap = avail // (2 * row_bytes) if row_bytes else S   # 2 buffers within budget
    ts_target = (8 << 20) // row_bytes if row_bytes else S  # aim for <= ~8 MiB/buffer
    ts = min(S, ts_cap, max(ts_target, align))
    ts = max(align, (ts // align) * align)
    ts = min(ts, S)
    if ts < 1:
        # TODO(synk): for very large D the x tile and w1 cannot both fit VMEM even at
        # ts=align; that case needs an extra D/K grid axis (tile x as (tb, ts, td) and
        # loop the finalize matmul over K chunks). Not needed at these model sizes.
        ts = min(S, align)
    return tb, ts


def classifier_head(x, w1, b1, w2t, b2, *, tb=None, ts=None, out_dtype=None):
    B, S, D = x.shape
    H = w1.shape[1]
    out_dtype = out_dtype if out_dtype is not None else x.dtype

    vmem_limit = _vmem_limit_bytes()
    auto_tb, auto_ts = _derive_tiles(B, S, D, H, x.dtype, w1.dtype, vmem_limit)
    tb = min(tb if tb is not None else auto_tb, B)
    ts = min(ts if ts is not None else auto_ts, S)

    grid = (pl.cdiv(B, tb), pl.cdiv(S, ts))
    ragged_s = (S % ts) != 0

    # If the per-step x DMA is small and there are several reduction steps, go 3-deep
    # so DMA latency stays hidden; otherwise the default 2-deep pipeline is plenty.
    x_tile_bytes = tb * ts * D * jnp.dtype(x.dtype).itemsize
    x_buffers = 3 if (x_tile_bytes < 512 * 1024 and grid[1] > 2) else 2

    kernel = _make_kernel(seq_len=S, ts=ts, inv_s=1.0 / float(S), ragged_s=ragged_s)

    return pl.pallas_call(
        kernel,
        out_shape=jax.ShapeDtypeStruct((B, 1), out_dtype),
        grid_spec=pltpu.PrefetchScalarGridSpec(
            num_scalar_prefetch=0,
            grid=grid,
            in_specs=[
                # x: tiled over batch and sequence; D full-width on lanes.
                pl.BlockSpec((tb, ts, D), lambda b, s: (b, s, 0),
                             pipeline_mode=pl.Buffered(x_buffers)),
                # Resident weights/biases: constant index_map -> one DMA total, so
                # single-buffer them to free VMEM for the streaming x tile.
                pl.BlockSpec((D, H), lambda b, s: (0, 0),
                             pipeline_mode=pl.Buffered(1)),
                pl.BlockSpec((1, H), lambda b, s: (0, 0),
                             pipeline_mode=pl.Buffered(1)),
                pl.BlockSpec((1, H), lambda b, s: (0, 0),
                             pipeline_mode=pl.Buffered(1)),
                # Scalar bias in SMEM.
                pl.BlockSpec(memory_space=pltpu.MemorySpace.SMEM),
            ],
            out_specs=pl.BlockSpec((tb, 1), lambda b, s: (b, 0)),
            scratch_shapes=[pltpu.VMEM((tb, D), jnp.float32)],
        ),
        compiler_params=pltpu.CompilerParams(
            # batch axis parallel (v7x dual-TC), sequence axis is the reduction.
            dimension_semantics=("parallel", "arbitrary"),
            vmem_limit_bytes=vmem_limit,
        ),
    )(x, w1, b1, w2t, b2)


def init_params(key, d_model):
    # Deterministic synthetic init (uniform, roughly like torch's default bounds).
    h = d_model // 2
    k1, k2, k3, k4 = jax.random.split(key, 4)
    lim1 = 1.0 / jnp.sqrt(d_model)
    lim2 = 1.0 / jnp.sqrt(h)
    w1 = jax.random.uniform(k1, (d_model, h), jnp.float32, -lim1, lim1)   # [in, out]
    b1 = jax.random.uniform(k2, (1, h), jnp.float32, -lim1, lim1)
    w2t = jax.random.uniform(k3, (1, h), jnp.float32, -lim2, lim2)        # [out=1, in]
    b2 = jax.random.uniform(k4, (1, 1), jnp.float32, -lim2, lim2)
    return w1, b1, w2t, b2


def reference(x, w1, b1, w2t, b2):
    pooled = jnp.mean(x.astype(jnp.float32), axis=1)
    h = jnp.maximum(pooled @ w1 + b1, 0.0)
    return h @ w2t.T + b2


if __name__ == "__main__":
    key = jax.random.PRNGKey(0)
    kx, kp, kx2 = jax.random.split(key, 3)

    # Case 1: small, evenly tiled shapes (budget-derived ts covers S in one step).
    B, S, D = 8, 32, 128            # d_model=128 -> hidden=64
    x = jax.random.normal(kx, (B, S, D), jnp.float32)
    w1, b1, w2t, b2 = init_params(kp, D)

    out = jax.block_until_ready(classifier_head(x, w1, b1, w2t, b2))
    ref = reference(x, w1, b1, w2t, b2)
    assert out.shape == (B, 1)
    assert jnp.allclose(out, ref, atol=1e-4, rtol=1e-4), (out, ref)

    # Case 2: ragged sequence length with a forced small ts -> exercises the masked
    # tail tile, the multi-step S reduction and the deeper x pipeline.
    S2 = 40
    x2 = jax.random.normal(kx2, (B, S2, D), jnp.float32)
    out2 = jax.block_until_ready(classifier_head(x2, w1, b1, w2t, b2, ts=16))
    ref2 = reference(x2, w1, b1, w2t, b2)
    assert out2.shape == (B, 1)
    assert jnp.allclose(out2, ref2, atol=1e-4, rtol=1e-4), (out2, ref2)

    print("KERNEL_OK")
</pallas_src>

<mosaic_0001>
module attributes {stable_mosaic.version = 11 : i64} {
  func.func @kernel(%arg0: i32, %arg1: i32, %arg2: memref<8x32x128xf32, #tpu.memory_space<vmem>>, %arg3: memref<128x64xf32, #tpu.memory_space<vmem>>, %arg4: memref<1x64xf32, #tpu.memory_space<vmem>>, %arg5: memref<1x64xf32, #tpu.memory_space<vmem>>, %arg6: memref<1x1xf32, #tpu.memory_space<smem>>, %arg7: memref<8x1xf32, #tpu.memory_space<vmem>>, %arg8: memref<8x128xf32, #tpu.memory_space<vmem>>) attributes {dimension_semantics = [#tpu.dimension_semantics<parallel>, #tpu.dimension_semantics<arbitrary>], iteration_bounds = array<i64: 1, 1>, scalar_prefetch = 0 : i64, scratch_operands = 1 : i64, tpu.core_type = #tpu.core_type<tc>, window_params = [{pipeline_mode = #tpu.pipeline_mode<double_buffered>, transform_indices = @transform_0, window_bounds = array<i64: 8, 32, 128>}, {pipeline_mode = #tpu.pipeline_mode<synchronous>, transform_indices = @transform_1, window_bounds = array<i64: 128, 64>}, {pipeline_mode = #tpu.pipeline_mode<synchronous>, transform_indices = @transform_2, window_bounds = array<i64: 1, 64>}, {pipeline_mode = #tpu.pipeline_mode<synchronous>, transform_indices = @transform_3, window_bounds = array<i64: 1, 64>}, {transform_indices = @transform_4, window_bounds = array<i64: 1, 1>}, {transform_indices = @transform_5, window_bounds = array<i64: 8, 1>}]} {
    %c0_i32 = arith.constant 0 : i32
    %0 = arith.cmpi eq, %arg1, %c0_i32 : i32
    %1 = arith.extui %0 : i1 to i32
    %c0_i32_0 = arith.constant 0 : i32
    %2 = arith.cmpi ne, %1, %c0_i32_0 : i32
    scf.if %2 {
      %cst_9 = arith.constant 0.000000e+00 : f32
      %11 = vector.broadcast %cst_9 : f32 to vector<8x128xf32>
      %c0_10 = arith.constant 0 : index
      %c0_11 = arith.constant 0 : index
      %12 = vector.load %arg8[%c0_10, %c0_11] : memref<8x128xf32, #tpu.memory_space<vmem>>, vector<8x128xf32>
      tpu.vector_store %arg8[%c0_10, %c0_11], %11 {strides = array<i32>} : memref<8x128xf32, #tpu.memory_space<vmem>>, vector<8x128xf32>,
    } else {
    }
    %c0 = arith.constant 0 : index
    %c0_1 = arith.constant 0 : index
    %c0_2 = arith.constant 0 : index
    %3 = vector.load %arg2[%c0, %c0_1, %c0_2] : memref<8x32x128xf32, #tpu.memory_space<vmem>>, vector<8x32x128xf32>
    %c0_3 = arith.constant 0 : index
    %c0_4 = arith.constant 0 : index
    %4 = vector.load %arg8[%c0_3, %c0_4] : memref<8x128xf32, #tpu.memory_space<vmem>>, vector<8x128xf32>
    %cst = arith.constant dense<0.000000e+00> : vector<8x128xf32>
    %5 = vector.multi_reduction <add>, %3, %cst [1] : vector<8x32x128xf32> to vector<8x128xf32>
    %6 = arith.addf %4, %5 : vector<8x128xf32>
    %c0_5 = arith.constant 0 : index
    %c0_6 = arith.constant 0 : index
    %7 = vector.load %arg8[%c0_5, %c0_6] : memref<8x128xf32, #tpu.memory_space<vmem>>, vector<8x128xf32>
    tpu.vector_store %arg8[%c0_5, %c0_6], %6 {strides = array<i32>} : memref<8x128xf32, #tpu.memory_space<vmem>>, vector<8x128xf32>,
    %c0_i32_7 = arith.constant 0 : i32
    %8 = arith.cmpi eq, %arg1, %c0_i32_7 : i32
    %9 = arith.extui %8 : i1 to i32
    %c0_i32_8 = arith.constant 0 : i32
    %10 = arith.cmpi ne, %9, %c0_i32_8 : i32
    scf.if %10 {
      %c0_9 = arith.constant 0 : index
      %c0_10 = arith.constant 0 : index
      %11 = vector.load %arg8[%c0_9, %c0_10] : memref<8x128xf32, #tpu.memory_space<vmem>>, vector<8x128xf32>
      %cst_11 = arith.constant 3.125000e-02 : f32
      %12 = vector.broadcast %cst_11 : f32 to vector<8x128xf32>
      %13 = arith.mulf %11, %12 : vector<8x128xf32>
      %c0_12 = arith.constant 0 : index
      %c0_13 = arith.constant 0 : index
      %14 = vector.load %arg3[%c0_12, %c0_13] : memref<128x64xf32, #tpu.memory_space<vmem>>, vector<128x64xf32>
      %cst_14 = arith.constant dense<0.000000e+00> : vector<8x64xf32>
      %15 = tpu.matmul %13, %14, %cst_14 {dimension_numbers = #tpu.dot_dimension_numbers<[1], [0], [0], [1], [0, 0, 1, 1], [], []>} : vector<8x128xf32>, vector<128x64xf32>, vector<8x64xf32> -> vector<8x64xf32>
      %c0_15 = arith.constant 0 : index
      %c0_16 = arith.constant 0 : index
      %16 = vector.load %arg4[%c0_15, %c0_16] : memref<1x64xf32, #tpu.memory_space<vmem>>, vector<1x64xf32>
      %17 = vector.broadcast %16 : vector<1x64xf32> to vector<8x64xf32>
      %18 = arith.addf %15, %17 : vector<8x64xf32>
      %cst_17 = arith.constant 0.000000e+00 : f32
      %19 = vector.broadcast %cst_17 : f32 to vector<8x64xf32>
      %20 = arith.maximumf %18, %19 : vector<8x64xf32>
      %c0_18 = arith.constant 0 : index
      %c0_19 = arith.constant 0 : index
      %21 = vector.load %arg5[%c0_18, %c0_19] : memref<1x64xf32, #tpu.memory_space<vmem>>, vector<1x64xf32>
      %22 = vector.broadcast %21 : vector<1x64xf32> to vector<8x64xf32>
      %23 = arith.mulf %20, %22 : vector<8x64xf32>
      %cst_20 = arith.constant dense<0.000000e+00> : vector<8xf32>
      %24 = vector.multi_reduction <add>, %23, %cst_20 [1] : vector<8x64xf32> to vector<8xf32>
      %25 = vector.shape_cast %24 : vector<8xf32> to vector<8x1xf32>
      %c0_21 = arith.constant 0 : index
      %c0_22 = arith.constant 0 : index
      %26 = memref.load %arg6[%c0_21, %c0_22] : memref<1x1xf32, #tpu.memory_space<smem>>
      %27 = vector.broadcast %26 : f32 to vector<8x1xf32>
      %28 = arith.addf %25, %27 : vector<8x1xf32>
      %c0_23 = arith.constant 0 : index
      %c0_24 = arith.constant 0 : index
      %29 = vector.load %arg7[%c0_23, %c0_24] : memref<8x1xf32, #tpu.memory_space<vmem>>, vector<8x1xf32>
      tpu.vector_store %arg7[%c0_23, %c0_24], %28 {strides = array<i32>} : memref<8x1xf32, #tpu.memory_space<vmem>>, vector<8x1xf32>,
    } else {
    }
    return
  }
  func.func @transform_0(%arg0: i32, %arg1: i32) -> (i32, i32, i32) {
    %c0_i32 = arith.constant 0 : i32
    %c0_i32_0 = arith.constant 0 : i32
    return %arg0, %arg1, %c0_i32 : i32, i32, i32
  }
  func.func @transform_1(%arg0: i32, %arg1: i32) -> (i32, i32) {
    %c0_i32 = arith.constant 0 : i32
    %c0_i32_0 = arith.constant 0 : i32
    %c0_i32_1 = arith.constant 0 : i32
    return %c0_i32, %c0_i32_0 : i32, i32
  }
  func.func @transform_2(%arg0: i32, %arg1: i32) -> (i32, i32) {
    %c0_i32 = arith.constant 0 : i32
    %c0_i32_0 = arith.constant 0 : i32
    %c0_i32_1 = arith.constant 0 : i32
    return %c0_i32, %c0_i32_0 : i32, i32
  }
  func.func @transform_3(%arg0: i32, %arg1: i32) -> (i32, i32) {
    %c0_i32 = arith.constant 0 : i32
    %c0_i32_0 = arith.constant 0 : i32
    %c0_i32_1 = arith.constant 0 : i32
    return %c0_i32, %c0_i32_0 : i32, i32
  }
  func.func @transform_4(%arg0: i32, %arg1: i32) -> (i32, i32) {
    %c0_i32 = arith.constant 0 : i32
    %c0_i32_0 = arith.constant 0 : i32
    %c0_i32_1 = arith.constant 0 : i32
    return %c0_i32, %c0_i32_0 : i32, i32
  }
  func.func @transform_5(%arg0: i32, %arg1: i32) -> (i32, i32) {
    %c0_i32 = arith.constant 0 : i32
    %c0_i32_0 = arith.constant 0 : i32
    return %arg0, %c0_i32 : i32, i32
  }
}

</mosaic_0001>

<llo_original>
// kernel: tpu_custom_call.1
$region0: #{tpu_custom_call.1}
  #allocation0 [shape = 'u32[]', space=smem, size = 0x4, offset = 0x4, fixed_abs, tag = 'smem constant byte address 0x4 - core index']
  #allocation1 [shape = 'u32[72,128]{1,0:T(1,128)}', space=vmem, size = 0x9000, scoped, tag = 'internal scratch']
  #allocation2 [shape = 'f32[8,128]{1,0:T(8,128)}', space=vmem, size = 0x1000, scoped, tag = 'scratch operand']
  #allocation3 [shape = 'f32[1,1]{1,0:T(1,128)S(6)}', space=smem, size = 0x200, scoped, tag = 'scoped memory for tpu_custom_call.1']
  %s0 = inlined_call_operand.hbm [shape: f32[8,32,128], index: 0, kind: input, shape index: {}]
  %s1 = inlined_call_operand.vmem [shape: f32[128,64], index: 1, kind: input, shape index: {}]
  %s2 = inlined_call_operand.vmem [shape: f32[1,64], index: 2, kind: input, shape index: {}]
  %s3 = inlined_call_operand.vmem [shape: f32[1,64], index: 3, kind: input, shape index: {}]
  %s4 = inlined_call_operand.<no memory space> [shape: f32[1,1], index: 4, kind: input, shape index: {}]
  %s5 = inlined_call_operand.vmem [shape: f32[8,1], index: 5, kind: output, shape index: {}]
  %s6 = sld [smem:[#allocation0]]
  $region42: #{tpu_custom_call.1} parent=0
    _
  %s8 = ssub.s32 1, %s6
  %s9 = scalar_select 0, %s8, %s6
  %10 = sst [smem:[#allocation3]] %s4
  $region1: #{tpu_custom_call.1} parent=0
    #allocation4 [shape = 'u8[131072]{0}', space=vmem, size = 0x20000, scoped, tag = 'input window, operand 0, single buffered']
    #allocation5 [shape = 's32[1]{0}', space=sflag, size = 0x4, scoped, tag = 'scoped memory for tpu_custom_call.1']
    %11 = vsyncpa [#allocation5], 0
    // Predicated region
    $region2: #{tpu_custom_call.1} parent=1 // pred_check
      _
    $region3: #{tpu_custom_call.1} parent=1 // pred_check_branch
      %13 = sbr.rel (0) target = $region5
    $region4: #{tpu_custom_call.1} parent=1 // pred_region
      %15 = vsyncadd [#allocation5], 0
      %s16 = sshll.u32 %s0, 4
      %s17 = int_to_ptr.hbm [resolvable:$true] %s16
      %s18 = sshll.u32 [#allocation4], 4
      %s19 = int_to_ptr.vmem [resolvable:$true] %s18
      %24 = dma.hbm_to_vmem [thread:$0]  %s17, 4096, %s19, [#allocation5], 128, 128, 8
    $region5: #{tpu_custom_call.1} parent=1 // pred_fallthru
      _
    // Predicated region
    $region6: #{tpu_custom_call.1} parent=1 // pred_check
      _
    $region7: #{tpu_custom_call.1} parent=1 // pred_check_branch
      %26 = sbr.rel (0) target = $region9
    $region8: #{tpu_custom_call.1} parent=1 // pred_region
      _
    $region9: #{tpu_custom_call.1} parent=1 // pred_fallthru
      _
    // Predicated region
    $region10: #{tpu_custom_call.1} parent=1 // pred_check
      _
    $region11: #{tpu_custom_call.1} parent=1 // pred_check_branch
      %28 = sbr.rel (0) target = $region13
    $region12: #{tpu_custom_call.1} parent=1 // pred_region
      _
    $region13: #{tpu_custom_call.1} parent=1 // pred_fallthru
      _
    // Predicated region
    $region14: #{tpu_custom_call.1} parent=1 // pred_check
      _
    $region15: #{tpu_custom_call.1} parent=1 // pred_check_branch
      %30 = sbr.rel (0) target = $region17
    $region16: #{tpu_custom_call.1} parent=1 // pred_region
      _
    $region17: #{tpu_custom_call.1} parent=1 // pred_fallthru
      _
    // Predicated region
    $region18: #{tpu_custom_call.1} parent=1 // pred_check
      _
    $region19: #{tpu_custom_call.1} parent=1 // pred_check_branch
      %32 = sbr.rel (0) target = $region21
    $region20: #{tpu_custom_call.1} parent=1 // pred_region
      _
    $region21: #{tpu_custom_call.1} parent=1 // pred_fallthru
      _
    // Predicated region
    $region22: #{tpu_custom_call.1} parent=1 // pred_check
      _
    $region23: #{tpu_custom_call.1} parent=1 // pred_check_branch
      %34 = sbr.rel (0) target = $region25
    $region24: #{tpu_custom_call.1} parent=1 // pred_region
      %36 = dma.done [#allocation5], 4096
    $region25: #{tpu_custom_call.1} parent=1 // pred_fallthru
      _
    %p37 = scmp.eq.s32.totalorder 0, 0
    // Predicated region
    $region26: #{tpu_custom_call.1} parent=1 // pred_check
      %p38 = pneg %p37
    $region27: #{tpu_custom_call.1} parent=1 // pred_check_branch
      %40 = sbr.rel (%p38) target = $region29
    $region28: #{tpu_custom_call.1} parent=1 // pred_region
      %41 = vst [vmem:[#allocation2] sm:$0xff] 0.0
    $region29: #{tpu_custom_call.1} parent=1 // pred_fallthru
      _
    %v42 = vld [vmem:[#allocation4] sm:$0xff]
    %v43 = vld [vmem:[#allocation4 + $0x8] sm:$0xff]
    %v44 = vld [vmem:[#allocation4 + $0x10] sm:$0xff]
    %v45 = vld [vmem:[#allocation4 + $0x18] sm:$0xff]
    %v46 = vld [vmem:[#allocation4 + $0x20] sm:$0xff]
    %v47 = vld [vmem:[#allocation4 + $0x28] sm:$0xff]
    %v48 = vld [vmem:[#allocation4 + $0x30] sm:$0xff]
    %v49 = vld [vmem:[#allocation4 + $0x38] sm:$0xff]
    %v50 = vld [vmem:[#allocation4 + $0x40] sm:$0xff]
    %v51 = vld [vmem:[#allocation4 + $0x48] sm:$0xff]
    %v52 = vld [vmem:[#allocation4 + $0x50] sm:$0xff]
    %v53 = vld [vmem:[#allocation4 + $0x58] sm:$0xff]
    %v54 = vld [vmem:[#allocation4 + $0x60] sm:$0xff]
    %v55 = vld [vmem:[#allocation4 + $0x68] sm:$0xff]
    %v56 = vld [vmem:[#allocation4 + $0x70] sm:$0xff]
    %v57 = vld [vmem:[#allocation4 + $0x78] sm:$0xff]
    %v58 = vld [vmem:[#allocation4 + $0x80] sm:$0xff]
    %v59 = vld [vmem:[#allocation4 + $0x88] sm:$0xff]
    %v60 = vld [vmem:[#allocation4 + $0x90] sm:$0xff]
    %v61 = vld [vmem:[#allocation4 + $0x98] sm:$0xff]
    %v62 = vld [vmem:[#allocation4 + $0xa0] sm:$0xff]
    %v63 = vld [vmem:[#allocation4 + $0xa8] sm:$0xff]
    %v64 = vld [vmem:[#allocation4 + $0xb0] sm:$0xff]
    %v65 = vld [vmem:[#allocation4 + $0xb8] sm:$0xff]
    %v66 = vld [vmem:[#allocation4 + $0xc0] sm:$0xff]
    %v67 = vld [vmem:[#allocation4 + $0xc8] sm:$0xff]
    %v68 = vld [vmem:[#allocation4 + $0xd0] sm:$0xff]
    %v69 = vld [vmem:[#allocation4 + $0xd8] sm:$0xff]
    %v70 = vld [vmem:[#allocation4 + $0xe0] sm:$0xff]
    %v71 = vld [vmem:[#allocation4 + $0xe8] sm:$0xff]
    %v72 = vld [vmem:[#allocation4 + $0xf0] sm:$0xff]
    %v73 = vld [vmem:[#allocation4 + $0xf8] sm:$0xff]
    %v74 = vld [vmem:[#allocation2] sm:$0xff]
    %v75 = vadd.f32 %v42, %v43
    %v76 = vadd.f32 %v75, %v44
    %v77 = vadd.f32 %v76, %v45
    %v78 = vrot.slane %v77, 4
    %v79 = vadd.f32 %v77, %v78
    %v80 = vrot.slane %v79, 2
    %v81 = vadd.f32 %v79, %v80
    %v82 = vrot.slane %v81, 1
    %v83 = vadd.f32 %v81, %v82
    %v84 = vadd.f32 %v46, %v47
    %v85 = vadd.f32 %v84, %v48
    %v86 = vadd.f32 %v85, %v49
    %v87 = vrot.slane %v86, 4
    %v88 = vadd.f32 %v86, %v87
    %v89 = vrot.slane %v88, 2
    %v90 = vadd.f32 %v88, %v89
    %v91 = vrot.slane %v90, 1
    %v92 = vadd.f32 %v90, %v91
    %v93 = vadd.f32 %v50, %v51
    %v94 = vadd.f32 %v93, %v52
    %v95 = vadd.f32 %v94, %v53
    %v96 = vrot.slane %v95, 4
    %v97 = vadd.f32 %v95, %v96
    %v98 = vrot.slane %v97, 2
    %v99 = vadd.f32 %v97, %v98
    %v100 = vrot.slane %v99, 1
    %v101 = vadd.f32 %v99, %v100
    %v102 = vadd.f32 %v54, %v55
    %v103 = vadd.f32 %v102, %v56
    %v104 = vadd.f32 %v103, %v57
    %v105 = vrot.slane %v104, 4
    %v106 = vadd.f32 %v104, %v105
    %v107 = vrot.slane %v106, 2
    %v108 = vadd.f32 %v106, %v107
    %v109 = vrot.slane %v108, 1
    %v110 = vadd.f32 %v108, %v109
    %v111 = vadd.f32 %v58, %v59
    %v112 = vadd.f32 %v111, %v60
    %v113 = vadd.f32 %v112, %v61
    %v114 = vrot.slane %v113, 4
    %v115 = vadd.f32 %v113, %v114
    %v116 = vrot.slane %v115, 2
    %v117 = vadd.f32 %v115, %v116
    %v118 = vrot.slane %v117, 1
    %v119 = vadd.f32 %v117, %v118
    %v120 = vadd.f32 %v62, %v63
    %v121 = vadd.f32 %v120, %v64
    %v122 = vadd.f32 %v121, %v65
    %v123 = vrot.slane %v122, 4
    %v124 = vadd.f32 %v122, %v123
    %v125 = vrot.slane %v124, 2
    %v126 = vadd.f32 %v124, %v125
    %v127 = vrot.slane %v126, 1
    %v128 = vadd.f32 %v126, %v127
    %v129 = vadd.f32 %v66, %v67
    %v130 = vadd.f32 %v129, %v68
    %v131 = vadd.f32 %v130, %v69
    %v132 = vrot.slane %v131, 4
    %v133 = vadd.f32 %v131, %v132
    %v134 = vrot.slane %v133, 2
    %v135 = vadd.f32 %v133, %v134
    %v136 = vrot.slane %v135, 1
    %v137 = vadd.f32 %v135, %v136
    %v138 = vadd.f32 %v70, %v71
    %v139 = vadd.f32 %v138, %v72
    %v140 = vadd.f32 %v139, %v73
    %v141 = vrot.slane %v140, 4
    %v142 = vadd.f32 %v140, %v141
    %v143 = vrot.slane %v142, 2
    %v144 = vadd.f32 %v142, %v143
    %v145 = vrot.slane %v144, 1
    %v146 = vadd.f32 %v144, %v145
    %vm155 = vcmask 1041409
    %v156 = vsel %vm155, %v92, %v83
    %vm157 = vcmask 1042434
    %v158 = vsel %vm157, %v101, %v156
    %vm159 = vcmask 1043459
    %v160 = vsel %vm159, %v110, %v158
    %vm161 = vcmask 1044484
    %v162 = vsel %vm161, %v119, %v160
    %vm163 = vcmask 1045509
    %v164 = vsel %vm163, %v128, %v162
    %vm165 = vcmask 1046534
    %v166 = vsel %vm165, %v137, %v164
    %vm167 = vcmask 1047559
    %v168 = vsel %vm167, %v146, %v166
    %v170 = vadd.f32 %v74, %v168
    %171 = vst [vmem:[#allocation2] sm:$0xff] %v170
    // Predicated region
    $region30: #{tpu_custom_call.1} parent=1 // pred_check
      %p172 = pneg %p37
    $region31: #{tpu_custom_call.1} parent=1 // pred_check_branch
      %174 = sbr.rel (%p172) target = $region33
    $region32: #{tpu_custom_call.1} parent=1 // pred_region
      %v175 = vld [vmem:[#allocation2] sm:$0xff]
      %v176 = vmul.f32 %v175, 0.03125
      %v177 = vld [vmem:[%s1] sm:$0xff]
      %v178 = vld [vmem:[%s1 + $0x8] sm:$0xff]
      %v179 = vld [vmem:[%s1 + $0x10] sm:$0xff]
      %v180 = vld [vmem:[%s1 + $0x18] sm:$0xff]
      %v181 = vld [vmem:[%s1 + $0x20] sm:$0xff]
      %v182 = vld [vmem:[%s1 + $0x28] sm:$0xff]
      %v183 = vld [vmem:[%s1 + $0x30] sm:$0xff]
      %v184 = vld [vmem:[%s1 + $0x38] sm:$0xff]
      %v185 = vld [vmem:[%s1 + $0x40] sm:$0xff]
      %v186 = vld [vmem:[%s1 + $0x48] sm:$0xff]
      %v187 = vld [vmem:[%s1 + $0x50] sm:$0xff]
      %v188 = vld [vmem:[%s1 + $0x58] sm:$0xff]
      %v189 = vld [vmem:[%s1 + $0x60] sm:$0xff]
      %v190 = vld [vmem:[%s1 + $0x68] sm:$0xff]
      %v191 = vld [vmem:[%s1 + $0x70] sm:$0xff]
      %v192 = vld [vmem:[%s1 + $0x78] sm:$0xff]
      %v193 = vld [vmem:[%s2] sm:$0x1]
      %v195 = vperm.slane %v193, 0
      %197 = vmatpush.msra.mxu0 %v192
      %198 = vmatpush.msra.mxu0 %v191
      %199 = vmatpush.msra.mxu0 %v190
      %200 = vmatpush.msra.mxu0 %v189
      %201 = vmatpush.msra.mxu0 %v188
      %202 = vmatpush.msra.mxu0 %v187
      %203 = vmatpush.msra.mxu0 %v186
      %204 = vmatpush.msra.mxu0 %v185
      %205 = vmatpush.msra.mxu0 %v184
      %206 = vmatpush.msra.mxu0 %v183
      %207 = vmatpush.msra.mxu0 %v182
      %208 = vmatpush.msra.mxu0 %v181
      %209 = vmatpush.msra.mxu0 %v180
      %210 = vmatpush.msra.mxu0 %v179
      %211 = vmatpush.msra.mxu0 %v178
      %212 = vmatpush.msra.mxu0 %v177
      %213 = vmatmul.f32.gmra.mxu0 %v176
      %v214 = vpop.f32.mrf.mxu0
      %v215 = vadd.f32 %v195, %v214
      %216 = vdwg.mxu0
      %v217 = vmax.f32 %v215, 0.0
      %v218 = vld [vmem:[%s3] sm:$0x1]
      %v220 = vperm.slane %v218, 0
      %v222 = vmul.f32 %v217, %v220
      %vm223 = vcmask 523264
      %v224 = vsel %vm223, %v222, 0.0
      %225 = vadd.xlane.f32.xlu0 %v224
      %v226 = vpop.xlane.xlu0 %225
      %s227 = sld [smem:[#allocation3]]
      %v228 = vstv %s227
      %v229 = vadd.f32 %v226, %v228
      %vm230 = vcmask 7168
      %231 = vst.msk [vmem:[%s5] sm:$0xff] %vm230, %v229
    $region33: #{tpu_custom_call.1} parent=1 // pred_fallthru
      _
    // Predicated region
    $region34: #{tpu_custom_call.1} parent=1 // pred_check
      _
    $region35: #{tpu_custom_call.1} parent=1 // pred_check_branch
      %233 = sbr.rel (0) target = $region37
    $region36: #{tpu_custom_call.1} parent=1 // pred_region
      _
    $region37: #{tpu_custom_call.1} parent=1 // pred_fallthru
      _
    // Predicated region
    $region38: #{tpu_custom_call.1} parent=1 // pred_check
      _
    $region39: #{tpu_custom_call.1} parent=1 // pred_check_branch
      %235 = sbr.rel (0) target = $region41
    $region40: #{tpu_custom_call.1} parent=1 // pred_region
      _
    $region41: #{tpu_custom_call.1} parent=1 // pred_fallthru
      _
    %236 = vsyncpa [#allocation5], 1

</llo_original>
